<compile_context>
chip_gen: v6e
topology: v6e:2x2x1
jax: 0.10.0
libtpu: 0.0.40
codegen_flags: <defaults>
</compile_context>

<pallas_src>
from functools import partial

import jax
import jax.numpy as jnp
from jax import lax
from jax.experimental import pallas as pl
from jax.experimental.pallas import tpu as pltpu


def attention_kernel(x_ref, wqkv_ref, bqkv_ref, wproj_ref, bproj_ref, o_ref,
                     *, num_heads, head_dim, scale):
    # x_ref block: (1, N, C)  -- one batch element per grid step
    x = x_ref[0].astype(jnp.bfloat16)                 # (N, C)  bf16 MXU operand
    wqkv = wqkv_ref[...]                              # (C, 3C) bf16
    bqkv = bqkv_ref[...]                              # (1, 3C) f32

    # qkv projection (bf16 operands, f32 accumulation on MXU)
    qkv = jnp.dot(x, wqkv, preferred_element_type=jnp.float32) + bqkv   # (N, 3C) f32
    C = x.shape[-1]
    D = head_dim

    # Per-head scaled-dot-product attention.  H is small; keep the unrolled
    # loop but avoid transposes and partial-lane stores.
    # TODO(synk): for production ViT (H=12+, N=197+) move heads / query tiles
    # onto a grid axis instead of relying on Python unrolling.
    head_outs = []
    for h in range(num_heads):
        # Fold softmax scale into q (O(N*D) work instead of O(N*N)).
        q = (qkv[:, h * D:(h + 1) * D] * scale).astype(jnp.bfloat16)          # (N, D)
        k = qkv[:, C + h * D:C + (h + 1) * D].astype(jnp.bfloat16)            # (N, D)
        v = qkv[:, 2 * C + h * D:2 * C + (h + 1) * D].astype(jnp.bfloat16)    # (N, D)

        # Contract on the shared last dim: s = q @ k^T without materializing k.T.
        s = lax.dot_general(q, k, dimension_numbers=(((1,), (1,)), ((), ())),
                            preferred_element_type=jnp.float32)               # (N, N) f32

        # Numerically-stable softmax; reciprocal on the EUP (free slot).
        s = s - jnp.max(s, axis=-1, keepdims=True)
        p = jnp.exp(s)
        inv = pl.reciprocal(jnp.sum(p, axis=-1, keepdims=True), approx=True)
        p = (p * inv).astype(jnp.bfloat16)

        head_outs.append(jnp.dot(p, v, preferred_element_type=jnp.float32))   # (N, D) f32

    # One lane-dense (N, C) context slab -> projection matmul (no VMEM scratch).
    ctx = jnp.concatenate(head_outs, axis=-1).astype(jnp.bfloat16)            # (N, C)
    out = jnp.dot(ctx, wproj_ref[...],
                  preferred_element_type=jnp.float32) + bproj_ref[...]        # (N, C) f32
    o_ref[0] = out.astype(o_ref.dtype)


def vit_attention(x, wqkv_t, bqkv, wproj_t, bproj, *, num_heads):
    B, N, C = x.shape
    head_dim = C // num_heads
    scale = head_dim ** (-0.5)

    # Cast weights once outside the kernel: halves their VMEM footprint and
    # HBM DMA bytes; biases stay f32 (added to the f32 accumulator).
    wqkv_bf = wqkv_t.astype(jnp.bfloat16)
    wproj_bf = wproj_t.astype(jnp.bfloat16)
    bqkv2 = bqkv.reshape(1, -1).astype(jnp.float32)
    bproj2 = bproj.reshape(1, -1).astype(jnp.float32)

    kernel = partial(attention_kernel, num_heads=num_heads,
                     head_dim=head_dim, scale=scale)

    return pl.pallas_call(
        kernel,
        out_shape=jax.ShapeDtypeStruct((B, N, C), x.dtype),
        grid_spec=pltpu.PrefetchScalarGridSpec(
            num_scalar_prefetch=0,
            grid=(B,),
            in_specs=[
                pl.BlockSpec((1, N, C), lambda b: (b, 0, 0)),     # x
                pl.BlockSpec((C, 3 * C), lambda b: (0, 0)),       # wqkv^T (bf16)
                pl.BlockSpec((1, 3 * C), lambda b: (0, 0)),       # bqkv  (f32)
                pl.BlockSpec((C, C), lambda b: (0, 0)),           # wproj^T (bf16)
                pl.BlockSpec((1, C), lambda b: (0, 0)),           # bproj (f32)
            ],
            out_specs=pl.BlockSpec((1, N, C), lambda b: (b, 0, 0)),
        ),
        compiler_params=pltpu.CompilerParams(
            dimension_semantics=("parallel",)),
    )(x, wqkv_bf, bqkv2, wproj_bf, bproj2)


def ref_attention(x, wqkv_t, bqkv, wproj_t, bproj, *, num_heads):
    """Pure-JAX f32 reference mirroring the PyTorch forward exactly."""
    B, N, C = x.shape
    D = C // num_heads
    qkv = x @ wqkv_t + bqkv                              # (B, N, 3C)
    qkv = qkv.reshape(B, N, 3, num_heads, D).transpose(2, 0, 3, 1, 4)
    q, k, v = qkv[0], qkv[1], qkv[2]                     # (B, H, N, D)
    attn = jnp.einsum('bhnd,bhmd->bhnm', q, k) * (D ** (-0.5))
    attn = jax.nn.softmax(attn, axis=-1)
    out = jnp.einsum('bhnm,bhmd->bhnd', attn, v)
    out = out.transpose(0, 2, 1, 3).reshape(B, N, C)
    return out @ wproj_t + bproj


if __name__ == "__main__":
    B, N, C, H = 2, 8, 32, 4   # batch, seq, embed_dim, num_heads (head_dim = 8)

    key = jax.random.PRNGKey(0)
    kx, kw1, kb1, kw2, kb2 = jax.random.split(key, 5)

    x = jax.random.normal(kx, (B, N, C), dtype=jnp.float32)

    # PyTorch nn.Linear(embed_dim, 3*embed_dim) weight is (3C, C); store transposed.
    wqkv_t = jax.random.normal(kw1, (C, 3 * C), dtype=jnp.float32) * (C ** -0.5)
    bqkv = jax.random.normal(kb1, (3 * C,), dtype=jnp.float32) * 0.02
    wproj_t = jax.random.normal(kw2, (C, C), dtype=jnp.float32) * (C ** -0.5)
    bproj = jax.random.normal(kb2, (C,), dtype=jnp.float32) * 0.02

    out = vit_attention(x, wqkv_t, bqkv, wproj_t, bproj, num_heads=H)
    out = jax.block_until_ready(out)

    ref = ref_attention(x, wqkv_t, bqkv, wproj_t, bproj, num_heads=H)
    assert out.shape == (B, N, C)
    # bf16 MXU operands (f32 accumulation) -> looser tolerance than pure-f32.
    assert jnp.allclose(out, ref, atol=5e-2, rtol=5e-2), \
        f"max abs err = {jnp.max(jnp.abs(out - ref))}"

    print("KERNEL_OK")
</pallas_src>

<mosaic_0001>
module attributes {stable_mosaic.version = 11 : i64} {
  func.func @attention_kernel(%arg0: i32, %arg1: memref<1x8x32xf32, #tpu.memory_space<vmem>>, %arg2: memref<32x96xbf16, #tpu.memory_space<vmem>>, %arg3: memref<1x96xf32, #tpu.memory_space<vmem>>, %arg4: memref<32x32xbf16, #tpu.memory_space<vmem>>, %arg5: memref<1x32xf32, #tpu.memory_space<vmem>>, %arg6: memref<1x8x32xf32, #tpu.memory_space<vmem>>) attributes {dimension_semantics = [#tpu.dimension_semantics<parallel>], iteration_bounds = array<i64: 2>, scalar_prefetch = 0 : i64, scratch_operands = 0 : i64, tpu.core_type = #tpu.core_type<tc>, window_params = [{transform_indices = @transform_0, window_bounds = array<i64: 1, 8, 32>}, {pipeline_mode = #tpu.pipeline_mode<synchronous>, transform_indices = @transform_1, window_bounds = array<i64: 32, 96>}, {pipeline_mode = #tpu.pipeline_mode<synchronous>, transform_indices = @transform_2, window_bounds = array<i64: 1, 96>}, {pipeline_mode = #tpu.pipeline_mode<synchronous>, transform_indices = @transform_3, window_bounds = array<i64: 32, 32>}, {pipeline_mode = #tpu.pipeline_mode<synchronous>, transform_indices = @transform_4, window_bounds = array<i64: 1, 32>}, {transform_indices = @transform_5, window_bounds = array<i64: 1, 8, 32>}]} {
    %c0 = arith.constant 0 : index
    %c0_0 = arith.constant 0 : index
    %c0_1 = arith.constant 0 : index
    %0 = vector.load %arg1[%c0, %c0_0, %c0_1] : memref<1x8x32xf32, #tpu.memory_space<vmem>>, vector<1x8x32xf32>
    %1 = vector.shape_cast %0 : vector<1x8x32xf32> to vector<8x32xf32>
    %2 = arith.truncf %1 : vector<8x32xf32> to vector<8x32xbf16>
    %c0_2 = arith.constant 0 : index
    %c0_3 = arith.constant 0 : index
    %3 = vector.load %arg2[%c0_2, %c0_3] : memref<32x96xbf16, #tpu.memory_space<vmem>>, vector<32x96xbf16>
    %c0_4 = arith.constant 0 : index
    %c0_5 = arith.constant 0 : index
    %4 = vector.load %arg3[%c0_4, %c0_5] : memref<1x96xf32, #tpu.memory_space<vmem>>, vector<1x96xf32>
    %cst = arith.constant dense<0.000000e+00> : vector<8x96xf32>
    %5 = tpu.matmul %2, %3, %cst {dimension_numbers = #tpu.dot_dimension_numbers<[1], [0], [0], [1], [0, 0, 1, 1], [], []>} : vector<8x32xbf16>, vector<32x96xbf16>, vector<8x96xf32> -> vector<8x96xf32>
    %6 = vector.broadcast %4 : vector<1x96xf32> to vector<8x96xf32>
    %7 = arith.addf %5, %6 : vector<8x96xf32>
    %8 = vector.extract_strided_slice %7 {offsets = [0, 0], sizes = [8, 8], strides = [1, 1]} : vector<8x96xf32> to vector<8x8xf32>
    %cst_6 = arith.constant 0.353553385 : f32
    %9 = vector.broadcast %cst_6 : f32 to vector<8x8xf32>
    %10 = arith.mulf %8, %9 : vector<8x8xf32>
    %11 = arith.truncf %10 : vector<8x8xf32> to vector<8x8xbf16>
    %12 = vector.extract_strided_slice %7 {offsets = [0, 32], sizes = [8, 8], strides = [1, 1]} : vector<8x96xf32> to vector<8x8xf32>
    %13 = arith.truncf %12 : vector<8x8xf32> to vector<8x8xbf16>
    %14 = vector.extract_strided_slice %7 {offsets = [0, 64], sizes = [8, 8], strides = [1, 1]} : vector<8x96xf32> to vector<8x8xf32>
    %15 = arith.truncf %14 : vector<8x8xf32> to vector<8x8xbf16>
    %cst_7 = arith.constant dense<0.000000e+00> : vector<8x8xf32>
    %16 = tpu.matmul %11, %13, %cst_7 {dimension_numbers = #tpu.dot_dimension_numbers<[1], [1], [0], [0], [0, 0, 1, 0], [], []>} : vector<8x8xbf16>, vector<8x8xbf16>, vector<8x8xf32> -> vector<8x8xf32>
    %cst_8 = arith.constant dense<0xFF800000> : vector<8xf32>
    %17 = vector.multi_reduction <maximumf>, %16, %cst_8 [1] : vector<8x8xf32> to vector<8xf32>
    %18 = vector.shape_cast %17 : vector<8xf32> to vector<8x1xf32>
    %19 = vector.broadcast %18 : vector<8x1xf32> to vector<8x8xf32>
    %20 = arith.subf %16, %19 : vector<8x8xf32>
    %21 = math.exp %20 : vector<8x8xf32>
    %cst_9 = arith.constant dense<0.000000e+00> : vector<8xf32>
    %22 = vector.multi_reduction <add>, %21, %cst_9 [1] : vector<8x8xf32> to vector<8xf32>
    %23 = vector.shape_cast %22 : vector<8xf32> to vector<8x1xf32>
    %24 = tpu.reciprocal %23 {approx = true} : vector<8x1xf32> -> vector<8x1xf32>
    %25 = vector.broadcast %24 : vector<8x1xf32> to vector<8x8xf32>
    %26 = arith.mulf %21, %25 : vector<8x8xf32>
    %27 = arith.truncf %26 : vector<8x8xf32> to vector<8x8xbf16>
    %cst_10 = arith.constant dense<0.000000e+00> : vector<8x8xf32>
    %28 = tpu.matmul %27, %15, %cst_10 {dimension_numbers = #tpu.dot_dimension_numbers<[1], [0], [0], [1], [0, 0, 1, 1], [], []>} : vector<8x8xbf16>, vector<8x8xbf16>, vector<8x8xf32> -> vector<8x8xf32>
    %29 = vector.extract_strided_slice %7 {offsets = [0, 8], sizes = [8, 8], strides = [1, 1]} : vector<8x96xf32> to vector<8x8xf32>
    %cst_11 = arith.constant 0.353553385 : f32
    %30 = vector.broadcast %cst_11 : f32 to vector<8x8xf32>
    %31 = arith.mulf %29, %30 : vector<8x8xf32>
    %32 = arith.truncf %31 : vector<8x8xf32> to vector<8x8xbf16>
    %33 = vector.extract_strided_slice %7 {offsets = [0, 40], sizes = [8, 8], strides = [1, 1]} : vector<8x96xf32> to vector<8x8xf32>
    %34 = arith.truncf %33 : vector<8x8xf32> to vector<8x8xbf16>
    %35 = vector.extract_strided_slice %7 {offsets = [0, 72], sizes = [8, 8], strides = [1, 1]} : vector<8x96xf32> to vector<8x8xf32>
    %36 = arith.truncf %35 : vector<8x8xf32> to vector<8x8xbf16>
    %cst_12 = arith.constant dense<0.000000e+00> : vector<8x8xf32>
    %37 = tpu.matmul %32, %34, %cst_12 {dimension_numbers = #tpu.dot_dimension_numbers<[1], [1], [0], [0], [0, 0, 1, 0], [], []>} : vector<8x8xbf16>, vector<8x8xbf16>, vector<8x8xf32> -> vector<8x8xf32>
    %cst_13 = arith.constant dense<0xFF800000> : vector<8xf32>
    %38 = vector.multi_reduction <maximumf>, %37, %cst_13 [1] : vector<8x8xf32> to vector<8xf32>
    %39 = vector.shape_cast %38 : vector<8xf32> to vector<8x1xf32>
    %40 = vector.broadcast %39 : vector<8x1xf32> to vector<8x8xf32>
    %41 = arith.subf %37, %40 : vector<8x8xf32>
    %42 = math.exp %41 : vector<8x8xf32>
    %cst_14 = arith.constant dense<0.000000e+00> : vector<8xf32>
    %43 = vector.multi_reduction <add>, %42, %cst_14 [1] : vector<8x8xf32> to vector<8xf32>
    %44 = vector.shape_cast %43 : vector<8xf32> to vector<8x1xf32>
    %45 = tpu.reciprocal %44 {approx = true} : vector<8x1xf32> -> vector<8x1xf32>
    %46 = vector.broadcast %45 : vector<8x1xf32> to vector<8x8xf32>
    %47 = arith.mulf %42, %46 : vector<8x8xf32>
    %48 = arith.truncf %47 : vector<8x8xf32> to vector<8x8xbf16>
    %cst_15 = arith.constant dense<0.000000e+00> : vector<8x8xf32>
    %49 = tpu.matmul %48, %36, %cst_15 {dimension_numbers = #tpu.dot_dimension_numbers<[1], [0], [0], [1], [0, 0, 1, 1], [], []>} : vector<8x8xbf16>, vector<8x8xbf16>, vector<8x8xf32> -> vector<8x8xf32>
    %50 = vector.extract_strided_slice %7 {offsets = [0, 16], sizes = [8, 8], strides = [1, 1]} : vector<8x96xf32> to vector<8x8xf32>
    %cst_16 = arith.constant 0.353553385 : f32
    %51 = vector.broadcast %cst_16 : f32 to vector<8x8xf32>
    %52 = arith.mulf %50, %51 : vector<8x8xf32>
    %53 = arith.truncf %52 : vector<8x8xf32> to vector<8x8xbf16>
    %54 = vector.extract_strided_slice %7 {offsets = [0, 48], sizes = [8, 8], strides = [1, 1]} : vector<8x96xf32> to vector<8x8xf32>
    %55 = arith.truncf %54 : vector<8x8xf32> to vector<8x8xbf16>
    %56 = vector.extract_strided_slice %7 {offsets = [0, 80], sizes = [8, 8], strides = [1, 1]} : vector<8x96xf32> to vector<8x8xf32>
    %57 = arith.truncf %56 : vector<8x8xf32> to vector<8x8xbf16>
    %cst_17 = arith.constant dense<0.000000e+00> : vector<8x8xf32>
    %58 = tpu.matmul %53, %55, %cst_17 {dimension_numbers = #tpu.dot_dimension_numbers<[1], [1], [0], [0], [0, 0, 1, 0], [], []>} : vector<8x8xbf16>, vector<8x8xbf16>, vector<8x8xf32> -> vector<8x8xf32>
    %cst_18 = arith.constant dense<0xFF800000> : vector<8xf32>
    %59 = vector.multi_reduction <maximumf>, %58, %cst_18 [1] : vector<8x8xf32> to vector<8xf32>
    %60 = vector.shape_cast %59 : vector<8xf32> to vector<8x1xf32>
    %61 = vector.broadcast %60 : vector<8x1xf32> to vector<8x8xf32>
    %62 = arith.subf %58, %61 : vector<8x8xf32>
    %63 = math.exp %62 : vector<8x8xf32>
    %cst_19 = arith.constant dense<0.000000e+00> : vector<8xf32>
    %64 = vector.multi_reduction <add>, %63, %cst_19 [1] : vector<8x8xf32> to vector<8xf32>
    %65 = vector.shape_cast %64 : vector<8xf32> to vector<8x1xf32>
    %66 = tpu.reciprocal %65 {approx = true} : vector<8x1xf32> -> vector<8x1xf32>
    %67 = vector.broadcast %66 : vector<8x1xf32> to vector<8x8xf32>
    %68 = arith.mulf %63, %67 : vector<8x8xf32>
    %69 = arith.truncf %68 : vector<8x8xf32> to vector<8x8xbf16>
    %cst_20 = arith.constant dense<0.000000e+00> : vector<8x8xf32>
    %70 = tpu.matmul %69, %57, %cst_20 {dimension_numbers = #tpu.dot_dimension_numbers<[1], [0], [0], [1], [0, 0, 1, 1], [], []>} : vector<8x8xbf16>, vector<8x8xbf16>, vector<8x8xf32> -> vector<8x8xf32>
    %71 = vector.extract_strided_slice %7 {offsets = [0, 24], sizes = [8, 8], strides = [1, 1]} : vector<8x96xf32> to vector<8x8xf32>
    %cst_21 = arith.constant 0.353553385 : f32
    %72 = vector.broadcast %cst_21 : f32 to vector<8x8xf32>
    %73 = arith.mulf %71, %72 : vector<8x8xf32>
    %74 = arith.truncf %73 : vector<8x8xf32> to vector<8x8xbf16>
    %75 = vector.extract_strided_slice %7 {offsets = [0, 56], sizes = [8, 8], strides = [1, 1]} : vector<8x96xf32> to vector<8x8xf32>
    %76 = arith.truncf %75 : vector<8x8xf32> to vector<8x8xbf16>
    %77 = vector.extract_strided_slice %7 {offsets = [0, 88], sizes = [8, 8], strides = [1, 1]} : vector<8x96xf32> to vector<8x8xf32>
    %78 = arith.truncf %77 : vector<8x8xf32> to vector<8x8xbf16>
    %cst_22 = arith.constant dense<0.000000e+00> : vector<8x8xf32>
    %79 = tpu.matmul %74, %76, %cst_22 {dimension_numbers = #tpu.dot_dimension_numbers<[1], [1], [0], [0], [0, 0, 1, 0], [], []>} : vector<8x8xbf16>, vector<8x8xbf16>, vector<8x8xf32> -> vector<8x8xf32>
    %cst_23 = arith.constant dense<0xFF800000> : vector<8xf32>
    %80 = vector.multi_reduction <maximumf>, %79, %cst_23 [1] : vector<8x8xf32> to vector<8xf32>
    %81 = vector.shape_cast %80 : vector<8xf32> to vector<8x1xf32>
    %82 = vector.broadcast %81 : vector<8x1xf32> to vector<8x8xf32>
    %83 = arith.subf %79, %82 : vector<8x8xf32>
    %84 = math.exp %83 : vector<8x8xf32>
    %cst_24 = arith.constant dense<0.000000e+00> : vector<8xf32>
    %85 = vector.multi_reduction <add>, %84, %cst_24 [1] : vector<8x8xf32> to vector<8xf32>
    %86 = vector.shape_cast %85 : vector<8xf32> to vector<8x1xf32>
    %87 = tpu.reciprocal %86 {approx = true} : vector<8x1xf32> -> vector<8x1xf32>
    %88 = vector.broadcast %87 : vector<8x1xf32> to vector<8x8xf32>
    %89 = arith.mulf %84, %88 : vector<8x8xf32>
    %90 = arith.truncf %89 : vector<8x8xf32> to vector<8x8xbf16>
    %cst_25 = arith.constant dense<0.000000e+00> : vector<8x8xf32>
    %91 = tpu.matmul %90, %78, %cst_25 {dimension_numbers = #tpu.dot_dimension_numbers<[1], [0], [0], [1], [0, 0, 1, 1], [], []>} : vector<8x8xbf16>, vector<8x8xbf16>, vector<8x8xf32> -> vector<8x8xf32>
    %92 = tpu.concatenate %28, %49, %70, %91 in 1 : vector<8x8xf32>, vector<8x8xf32>, vector<8x8xf32>, vector<8x8xf32> -> vector<8x32xf32>
    %93 = arith.truncf %92 : vector<8x32xf32> to vector<8x32xbf16>
    %c0_26 = arith.constant 0 : index
    %c0_27 = arith.constant 0 : index
    %94 = vector.load %arg4[%c0_26, %c0_27] : memref<32x32xbf16, #tpu.memory_space<vmem>>, vector<32x32xbf16>
    %cst_28 = arith.constant dense<0.000000e+00> : vector<8x32xf32>
    %95 = tpu.matmul %93, %94, %cst_28 {dimension_numbers = #tpu.dot_dimension_numbers<[1], [0], [0], [1], [0, 0, 1, 1], [], []>} : vector<8x32xbf16>, vector<32x32xbf16>, vector<8x32xf32> -> vector<8x32xf32>
    %c0_29 = arith.constant 0 : index
    %c0_30 = arith.constant 0 : index
    %96 = vector.load %arg5[%c0_29, %c0_30] : memref<1x32xf32, #tpu.memory_space<vmem>>, vector<1x32xf32>
    %97 = vector.broadcast %96 : vector<1x32xf32> to vector<8x32xf32>
    %98 = arith.addf %95, %97 : vector<8x32xf32>
    %c0_31 = arith.constant 0 : index
    %c0_32 = arith.constant 0 : index
    %c0_33 = arith.constant 0 : index
    %99 = vector.load %arg6[%c0_31, %c0_32, %c0_33] : memref<1x8x32xf32, #tpu.memory_space<vmem>>, vector<1x8x32xf32>
    %100 = vector.shape_cast %99 : vector<1x8x32xf32> to vector<8x32xf32>
    %101 = vector.shape_cast %98 : vector<8x32xf32> to vector<1x8x32xf32>
    tpu.vector_store %arg6[%c0_31, %c0_32, %c0_33], %101 {strides = array<i32>} : memref<1x8x32xf32, #tpu.memory_space<vmem>>, vector<1x8x32xf32>,
    return
  }
  func.func @transform_0(%arg0: i32) -> (i32, i32, i32) {
    %c0_i32 = arith.constant 0 : i32
    %c0_i32_0 = arith.constant 0 : i32
    %c0_i32_1 = arith.constant 0 : i32
    return %arg0, %c0_i32, %c0_i32_0 : i32, i32, i32
  }
  func.func @transform_1(%arg0: i32) -> (i32, i32) {
    %c0_i32 = arith.constant 0 : i32
    %c0_i32_0 = arith.constant 0 : i32
    %c0_i32_1 = arith.constant 0 : i32
    return %c0_i32, %c0_i32_0 : i32, i32
  }
  func.func @transform_2(%arg0: i32) -> (i32, i32) {
    %c0_i32 = arith.constant 0 : i32
    %c0_i32_0 = arith.constant 0 : i32
    %c0_i32_1 = arith.constant 0 : i32
    return %c0_i32, %c0_i32_0 : i32, i32
  }
  func.func @transform_3(%arg0: i32) -> (i32, i32) {
    %c0_i32 = arith.constant 0 : i32
    %c0_i32_0 = arith.constant 0 : i32
    %c0_i32_1 = arith.constant 0 : i32
    return %c0_i32, %c0_i32_0 : i32, i32
  }
  func.func @transform_4(%arg0: i32) -> (i32, i32) {
    %c0_i32 = arith.constant 0 : i32
    %c0_i32_0 = arith.constant 0 : i32
    %c0_i32_1 = arith.constant 0 : i32
    return %c0_i32, %c0_i32_0 : i32, i32
  }
  func.func @transform_5(%arg0: i32) -> (i32, i32, i32) {
    %c0_i32 = arith.constant 0 : i32
    %c0_i32_0 = arith.constant 0 : i32
    %c0_i32_1 = arith.constant 0 : i32
    return %arg0, %c0_i32, %c0_i32_0 : i32, i32, i32
  }
}

</mosaic_0001>

<llo_original>
// kernel: tpu_custom_call.1
$region0: #{tpu_custom_call.1}
  #allocation0 [shape = 'u32[]', space=smem, size = 0x4, offset = 0x4, fixed_abs, tag = 'smem constant byte address 0x4 - core index']
  #allocation1 [shape = 'u32[144,128]{1,0:T(1,128)}', space=vmem, size = 0x12000, scoped, tag = 'internal scratch']
  %s0 = inlined_call_operand.hbm [shape: f32[2,8,32], index: 0, kind: input, shape index: {}]
  %s1 = inlined_call_operand.hbm [shape: bf16[32,96], index: 1, kind: input, shape index: {}]
  %s2 = inlined_call_operand.vmem [shape: f32[1,96], index: 2, kind: input, shape index: {}]
  %s3 = inlined_call_operand.hbm [shape: bf16[32,32], index: 3, kind: input, shape index: {}]
  %s4 = inlined_call_operand.vmem [shape: f32[1,32], index: 4, kind: input, shape index: {}]
  %s5 = inlined_call_operand.hbm [shape: f32[2,8,32], index: 5, kind: output, shape index: {}]
  %s6 = sld [smem:[#allocation0]]
  $region65: #{tpu_custom_call.1} parent=0
    _
  %s8 = ssub.s32 1, %s6
  %s9 = scalar_select 0, %s8, %s6
  $region1: #{tpu_custom_call.1} parent=0
    #allocation2 [shape = 'u8[8192]{0}', space=vmem, size = 0x2000, scoped, tag = 'input window, operand 0']
    #allocation3 [shape = 's32[2]{0}', space=sflag, size = 0x8, scoped, tag = 'scoped memory for tpu_custom_call.1']
    #allocation4 [shape = 's32[2]{0}', space=sflag, size = 0x8, scoped, tag = 'scoped memory for tpu_custom_call.1']
    #allocation5 [shape = 'u8[8192]{0}', space=vmem, size = 0x2000, scoped, tag = 'input window, operand 1, single buffered']
    #allocation6 [shape = 's32[1]{0}', space=sflag, size = 0x4, scoped, tag = 'scoped memory for tpu_custom_call.1']
    #allocation7 [shape = 'u8[8192]{0}', space=vmem, size = 0x2000, scoped, tag = 'input window, operand 3, single buffered']
    #allocation8 [shape = 'u8[8192]{0}', space=vmem, size = 0x2000, scoped, tag = 'output window, operand 0']
    %10 = vsyncpa [#allocation3], 0
    %s11 = scalar_lea.sflag [#allocation3], 1
    %12 = vsyncpa %s11, 0
    %13 = vsyncpa [#allocation6], 0
    %14 = vsyncpa [#allocation4], 0
    %s15 = scalar_lea.sflag [#allocation4], 1
    %16 = vsyncpa %s15, 0
    loop: start=0, step=1, limit=4
    $region2: #{tpu_custom_call.1} parent=1 // loop_pre_header
      _
    $region3: #{tpu_custom_call.1} parent=1 // loop_header
      %s18 = sphi 0, %s22
      %p19 = scmp.ge.s32.totalorder %s18, 4
      %s28 = sphi 0, %s30
      %s31 = sphi 0, %s28
      %s32 = sphi 0, %s31
      %s48 = sphi 0, %s32
      %s52 = sphi 0, %s52
      %s54 = sphi 0, %s52
      %s55 = sphi 0, %s54
      %s69 = sphi 0, %s55
      %s73 = sphi 0, %s73
      %s75 = sphi 0, %s73
      %s76 = sphi 0, %s75
      %s90 = sphi 0, %s76
      %s94 = sphi 0, %s94
      %s96 = sphi 0, %s94
      %s97 = sphi 0, %s96
      %s111 = sphi 0, %s97
      %s115 = sphi 0, %s115
      %s117 = sphi 0, %s115
      %s118 = sphi 0, %s117
      %s132 = sphi 0, %s118
      %s138 = sphi 0, %s140
      %s141 = sphi 0, %s138
      %s142 = sphi 0, %s141
      %s158 = sphi 0, %s142
    $region4: #{tpu_custom_call.1} parent=1 // loop_header_branch
      %21 = sbr.rel (%p19) target = $region8
    $region5: #{tpu_custom_call.1} parent=1 // loop_body
      %s23 = ssub.s32 %s18, 1
      %s24 = ssub.s32 %s18, 2
      %s25 = sadd.s32 %s18, 1
      %s26 = ssub.s32 %s18, %s25
      %p27 = scmp.eq.s32.totalorder %s26, 0
      %s29 = sadd.s32 %s28, 1
      %s30 = scalar_select %p27, %s28, %s29
      %p33 = pneg %p27
      %p34 = scmp.eq.s32.totalorder %s18, 1
      %p35 = por %p33, %p34
      %p36 = scmp.ne.s32.totalorder %s28, %s31
      %p37 = scmp.eq.s32.totalorder %s18, 0
      %p38 = por %p36, %p37
      %p39 = scmp.ne.s32.totalorder %s28, %s31
      %p40 = scmp.eq.s32.totalorder %s23, 1
      %p41 = por %p39, %p40
      %p42 = scmp.ne.s32.totalorder %s31, %s32
      %p43 = scmp.eq.s32.totalorder %s23, 0
      %p44 = por %p42, %p43
      %p45 = scmp.ne.s32.totalorder %s31, %s32
      %p46 = scmp.eq.s32.totalorder %s24, 1
      %p47 = por %p45, %p46
      %p49 = scmp.ne.s32.totalorder %s32, %s48
      %p50 = scmp.eq.s32.totalorder %s24, 0
      %p51 = por %p49, %p50
      %s53 = sadd.s32 %s52, 1
      %p56 = scmp.eq.s32.totalorder %s18, 1
      %p57 = scmp.ne.s32.totalorder %s52, %s54
      %p58 = scmp.eq.s32.totalorder %s18, 0
      %p59 = por %p57, %p58
      %p60 = scmp.ne.s32.totalorder %s52, %s54
      %p61 = scmp.eq.s32.totalorder %s23, 1
      %p62 = por %p60, %p61
      %p63 = scmp.ne.s32.totalorder %s54, %s55
      %p64 = scmp.eq.s32.totalorder %s23, 0
      %p65 = por %p63, %p64
      %p66 = scmp.ne.s32.totalorder %s54, %s55
      %p67 = scmp.eq.s32.totalorder %s24, 1
      %p68 = por %p66, %p67
      %p70 = scmp.ne.s32.totalorder %s55, %s69
      %p71 = scmp.eq.s32.totalorder %s24, 0
      %p72 = por %p70, %p71
      %s74 = sadd.s32 %s73, 1
      %p77 = scmp.eq.s32.totalorder %s18, 1
      %p78 = scmp.ne.s32.totalorder %s73, %s75
      %p79 = scmp.eq.s32.totalorder %s18, 0
      %p80 = por %p78, %p79
      %p81 = scmp.ne.s32.totalorder %s73, %s75
      %p82 = scmp.eq.s32.totalorder %s23, 1
      %p83 = por %p81, %p82
      %p84 = scmp.ne.s32.totalorder %s75, %s76
      %p85 = scmp.eq.s32.totalorder %s23, 0
      %p86 = por %p84, %p85
      %p87 = scmp.ne.s32.totalorder %s75, %s76
      %p88 = scmp.eq.s32.totalorder %s24, 1
      %p89 = por %p87, %p88
      %p91 = scmp.ne.s32.totalorder %s76, %s90
      %p92 = scmp.eq.s32.totalorder %s24, 0
      %p93 = por %p91, %p92
      %s95 = sadd.s32 %s94, 1
      %p98 = scmp.eq.s32.totalorder %s18, 1
      %p99 = scmp.ne.s32.totalorder %s94, %s96
      %p100 = scmp.eq.s32.totalorder %s18, 0
      %p101 = por %p99, %p100
      %p102 = scmp.ne.s32.totalorder %s94, %s96
      %p103 = scmp.eq.s32.totalorder %s23, 1
      %p104 = por %p102, %p103
      %p105 = scmp.ne.s32.totalorder %s96, %s97
      %p106 = scmp.eq.s32.totalorder %s23, 0
      %p107 = por %p105, %p106
      %p108 = scmp.ne.s32.totalorder %s96, %s97
      %p109 = scmp.eq.s32.totalorder %s24, 1
      %p110 = por %p108, %p109
      %p112 = scmp.ne.s32.totalorder %s97, %s111
      %p113 = scmp.eq.s32.totalorder %s24, 0
      %p114 = por %p112, %p113
      %s116 = sadd.s32 %s115, 1
      %p119 = scmp.eq.s32.totalorder %s18, 1
      %p120 = scmp.ne.s32.totalorder %s115, %s117
      %p121 = scmp.eq.s32.totalorder %s18, 0
      %p122 = por %p120, %p121
      %p123 = scmp.ne.s32.totalorder %s115, %s117
      %p124 = scmp.eq.s32.totalorder %s23, 1
      %p125 = por %p123, %p124
      %p126 = scmp.ne.s32.totalorder %s117, %s118
      %p127 = scmp.eq.s32.totalorder %s23, 0
      %p128 = por %p126, %p127
      %p129 = scmp.ne.s32.totalorder %s117, %s118
      %p130 = scmp.eq.s32.totalorder %s24, 1
      %p131 = por %p129, %p130
      %p133 = scmp.ne.s32.totalorder %s118, %s132
      %p134 = scmp.eq.s32.totalorder %s24, 0
      %p135 = por %p133, %p134
      %s136 = ssub.s32 %s18, %s25
      %p137 = scmp.eq.s32.totalorder %s136, 0
      %s139 = sadd.s32 %s138, 1
      %s140 = scalar_select %p137, %s138, %s139
      %p143 = pneg %p137
      %p144 = scmp.eq.s32.totalorder %s18, 1
      %p145 = por %p143, %p144
      %p146 = scmp.ne.s32.totalorder %s138, %s141
      %p147 = scmp.eq.s32.totalorder %s18, 0
      %p148 = por %p146, %p147
      %p149 = scmp.ne.s32.totalorder %s138, %s141
      %p150 = scmp.eq.s32.totalorder %s23, 1
      %p151 = por %p149, %p150
      %p152 = scmp.ne.s32.totalorder %s141, %s142
      %p153 = scmp.eq.s32.totalorder %s23, 0
      %p154 = por %p152, %p153
      %p155 = scmp.ne.s32.totalorder %s141, %s142
      %p156 = scmp.eq.s32.totalorder %s24, 1
      %p157 = por %p155, %p156
      %p159 = scmp.ne.s32.totalorder %s142, %s158
      %p160 = scmp.eq.s32.totalorder %s24, 0
      %p161 = por %p159, %p160
      %p162 = scmp.le.s32.totalorder 1, %s18
      %p163 = scmp.lt.s32.totalorder %s18, 3
      %p164 = pnand %p162, %p163
      %p165 = pneg %p164
      // Predicated region
      $region9: #{tpu_custom_call.1} parent=5 // pred_check
        _
      $region10: #{tpu_custom_call.1} parent=5 // pred_check_branch
        %167 = sbr.rel (%p164) target = $region12
      $region11: #{tpu_custom_call.1} parent=5 // pred_region
        %s168 = ssub.s32 %s18, 1
        // Predicated region
        $region13: #{tpu_custom_call.1} parent=11 // pred_check
          %p169 = pneg %p65
        $region14: #{tpu_custom_call.1} parent=11 // pred_check_branch
          %171 = sbr.rel (%p169) target = $region16
        $region15: #{tpu_custom_call.1} parent=11 // pred_region
          %s173 = ssub.s32 256, 256
          %174 = vsyncadd [#allocation6], %s173
          %s175 = sshll.u32 [#allocation5], 4
          %s176 = int_to_ptr.vmem [resolvable:$true] %s175
          %181 = dma.hbm_to_vmem [thread:$0]  %s1, 256, %s176, [#allocation6], 64, 64, 4
        $region16: #{tpu_custom_call.1} parent=11 // pred_fallthru
          _
        // Predicated region
        $region17: #{tpu_custom_call.1} parent=11 // pred_check
          %p182 = pneg %p86
        $region18: #{tpu_custom_call.1} parent=11 // pred_check_branch
          %184 = sbr.rel (%p182) target = $region20
        $region19: #{tpu_custom_call.1} parent=11 // pred_region
          _
        $region20: #{tpu_custom_call.1} parent=11 // pred_fallthru
          _
        // Predicated region
        $region21: #{tpu_custom_call.1} parent=11 // pred_check
          %p185 = pneg %p107
        $region22: #{tpu_custom_call.1} parent=11 // pred_check_branch
          %187 = sbr.rel (%p185) target = $region24
        $region23: #{tpu_custom_call.1} parent=11 // pred_region
          %s189 = ssub.s32 256, 256
          %190 = vsyncadd [#allocation6], %s189
          %s191 = sshll.u32 [#allocation7], 4
          %s192 = int_to_ptr.vmem [resolvable:$true] %s191
          %197 = dma.hbm_to_vmem [thread:$0]  %s3, 256, %s192, [#allocation6], 64, 64, 4
        $region24: #{tpu_custom_call.1} parent=11 // pred_fallthru
          _
        // Predicated region
        $region25: #{tpu_custom_call.1} parent=11 // pred_check
          %p198 = pneg %p128
        $region26: #{tpu_custom_call.1} parent=11 // pred_check_branch
          %200 = sbr.rel (%p198) target = $region28
        $region27: #{tpu_custom_call.1} parent=11 // pred_region
          _
        $region28: #{tpu_custom_call.1} parent=11 // pred_fallthru
          _
      $region12: #{tpu_custom_call.1} parent=5 // pred_fallthru
        _
      %p201 = scmp.lt.s32.totalorder %s18, 2
      // Predicated region
      $region29: #{tpu_custom_call.1} parent=5 // pred_check
        %p202 = pneg %p201
      $region30: #{tpu_custom_call.1} parent=5 // pred_check_branch
        %204 = sbr.rel (%p202) target = $region32
      $region31: #{tpu_custom_call.1} parent=5 // pred_region
        // Predicated region
        $region33: #{tpu_custom_call.1} parent=31 // pred_check
          %p205 = pneg %p38
        $region34: #{tpu_custom_call.1} parent=31 // pred_check_branch
          %207 = sbr.rel (%p205) target = $region36
        $region35: #{tpu_custom_call.1} parent=31 // pred_region
          %s208 = sand.u32 %s28, 1
          %s209 = scalar_lea.sflag [#allocation3], %s208
          %s210 = sand.u32 %s28, 1
          %s211 = smul.addr %s210, 8
          %s212 = scalar_lea.vmem [#allocation2], %s211
          %s214 = ssub.s32 128, 128
          %215 = vsyncadd %s209, %s214
          %s216 = smul.addr %s18, 128
          %s217 = scalar_lea.hbm %s0, %s216
          %s219 = sshll.u32 %s212, 4
          %s220 = int_to_ptr.vmem [resolvable:$true] %s219
          %222 = dma.hbm_to_vmem [thread:$0]  %s217, 128, %s220, %s209
        $region36: #{tpu_custom_call.1} parent=31 // pred_fallthru
          _
      $region32: #{tpu_custom_call.1} parent=5 // pred_fallthru
        _
      %p223 = scmp.le.s32.totalorder 1, %s18
      %p224 = scmp.lt.s32.totalorder %s18, 3
      %p225 = pnand %p223, %p224
      %p226 = pneg %p225
      // Predicated region
      $region37: #{tpu_custom_call.1} parent=5 // pred_check
        _
      $region38: #{tpu_custom_call.1} parent=5 // pred_check_branch
        %228 = sbr.rel (%p225) target = $region40
      $region39: #{tpu_custom_call.1} parent=5 // pred_region
        %s229 = ssub.s32 %s18, 1
        %s230 = sand.u32 %s31, 1
        %s231 = scalar_lea.sflag [#allocation3], %s230
        %s232 = sand.u32 %s31, 1
        %s233 = smul.addr %s232, 8
        %s234 = scalar_lea.vmem [#allocation2], %s233
        // Predicated region
        $region41: #{tpu_custom_call.1} parent=39 // pred_check
          %p235 = pneg %p44
        $region42: #{tpu_custom_call.1} parent=39 // pred_check_branch
          %237 = sbr.rel (%p235) target = $region44
        $region43: #{tpu_custom_call.1} parent=39 // pred_region
          %238 = dma.done %s231, 128
        $region44: #{tpu_custom_call.1} parent=39 // pred_fallthru
          _
        // Predicated region
        $region45: #{tpu_custom_call.1} parent=39 // pred_check
          %p239 = pneg %p65
        $region46: #{tpu_custom_call.1} parent=39 // pred_check_branch
          %241 = sbr.rel (%p239) target = $region48
        $region47: #{tpu_custom_call.1} parent=39 // pred_region
          %242 = dma.done [#allocation6], 256
        $region48: #{tpu_custom_call.1} parent=39 // pred_fallthru
          _
        // Predicated region
        $region49: #{tpu_custom_call.1} parent=39 // pred_check
          %p243 = pneg %p107
        $region50: #{tpu_custom_call.1} parent=39 // pred_check_branch
          %245 = sbr.rel (%p243) target = $region52
        $region51: #{tpu_custom_call.1} parent=39 // pred_region
          %246 = dma.done [#allocation6], 256
        $region52: #{tpu_custom_call.1} parent=39 // pred_fallthru
          _
        %s247 = sand.u32 %s31, 1
        %s248 = scalar_lea.sflag [#allocation3], %s247
        %s249 = sand.u32 %s31, 1
        %s250 = smul.addr %s249, 8
        %s251 = scalar_lea.vmem [#allocation2], %s250
        %p252 = pneg %p44
        %p253 = pneg %p41
        %p254 = pneg %p65
        %p255 = pneg %p62
        %p256 = pneg %p86
        %p257 = pneg %p83
        %p258 = pneg %p107
        %p259 = pneg %p104
        %p260 = pneg %p128
        %p261 = pneg %p125
        %p262 = pneg %p154
        %p263 = pneg %p151
        %s264 = sand.u32 %s141, 1
        %s265 = scalar_lea.sflag [#allocation4], %s264
        %s266 = sand.u32 %s141, 1
        %s267 = smul.addr %s266, 8
        %s268 = scalar_lea.vmem [#allocation8], %s267
        %v270 = vld [vmem:[%s234] sm:$0xff]
        %v271 = vpack.c.bf16 %v270, %v270
        %v272 = vld [vmem:[#allocation5] sm:$0xf]
        %v273 = vld [vmem:[#allocation5 + $0x4] sm:$0xf]
        %v274 = vld [vmem:[#allocation5 + $0x8] sm:$0xf]
        %v275 = vld [vmem:[#allocation5 + $0xc] sm:$0xf]
        %v276 = vld [vmem:[%s2] sm:$0x1]
        %v278 = vlaneseq
        %v279 = vshrl.u32 %v278, 7
        %v280 = vsub.s32 0, %v279
        %v281 = vrot.slane %v276, %v280
        %v287 = vunpack.c.l.b16 %v272
        %v288 = vunpack.c.l.b16 %v273
        %v289 = vunpack.c.l.b16 %v274
        %v290 = vunpack.c.l.b16 %v275
        %v291 = vpack.c.b16 %v288, %v287
        %v292 = vpack.c.b16 %v290, %v289
        %vm295 = vcmask 261120
        %v297 = vsel %vm295, %v271, 0
        %299 = vmatprep.subr.bf16.mxu0 0
        %300 = vmatpush1.bf16.msra.mxu0 0
        %301 = vmatprep.subr.bf16.mxu0 0
        %302 = vmatpush1.bf16.msra.mxu0 0
        %303 = vmatprep.subr.bf16.mxu0 0
        %304 = vmatpush1.bf16.msra.mxu0 0
        %305 = vmatprep.subr.bf16.mxu0 0
        %306 = vmatpush1.bf16.msra.mxu0 0
        %307 = vmatprep.subr.bf16.mxu0 0
        %308 = vmatpush1.bf16.msra.mxu0 0
        %309 = vmatprep.subr.bf16.mxu0 0
        %310 = vmatpush1.bf16.msra.mxu0 0
        %311 = vmatprep.subr.bf16.mxu0 0
        %312 = vmatpush1.bf16.msra.mxu0 %v292
        %313 = vmatprep.subr.bf16.mxu0 0
        %314 = vmatpush1.bf16.msra.mxu0 %v291
        %315 = vmatprep.subr.bf16.mxu0 0
        %316 = vmatpush2.bf16.msra.mxu0 0
        %317 = vmatprep.subr.bf16.mxu0 0
        %318 = vmatpush2.bf16.msra.mxu0 0
        %319 = vmatprep.subr.bf16.mxu0 0
        %320 = vmatpush2.bf16.msra.mxu0 0
        %321 = vmatprep.subr.bf16.mxu0 0
        %322 = vmatpush2.bf16.msra.mxu0 0
        %323 = vmatprep.subr.bf16.mxu0 0
        %324 = vmatpush2.bf16.msra.mxu0 0
        %325 = vmatprep.subr.bf16.mxu0 0
        %326 = vmatpush2.bf16.msra.mxu0 0
        %327 = vmatprep.subr.bf16.mxu0 0
        %328 = vmatpush2.bf16.msra.mxu0 0
        %329 = vmatprep.subr.bf16.mxu0 0
        %330 = vmatpush2.bf16.msra.mxu0 0
        %331 = vmatprep.mubr.bf16.mxu0 0
        %332 = vmatmul.mubr.bf16.gmra.mxu0 %v297
        %v333 = vpop.f32.mrf.mxu0
        %v334 = vadd.f32 %v281, %v333
        %v335 = vpop.f32.mrf.mxu0
        %v336 = vpop.f32.mrf.mxu0
        %v337 = vpop.f32.mrf.mxu0
        %338 = vdwg.mxu0
        %v339 = vmul.f32 %v334, 0.35355338
        %v340 = vpack.c.bf16 %v339, %v339
        %v341 = vpack.c.bf16 %v334, %v334
        %343 = vrot.lane.b32.xlu0 %v341, 96
        %v344 = vpop.permute.xlu0 %343
        %vm345 = vcmask 64512
        %v347 = vsel %vm345, %v340, 0
        %v350 = vsel %vm345, %v344, 0
        %352 = vmatprep.subr.bf16.mxu0 0
        %353 = vmatpush1.bf16.xpose.msra.mxu0 0
        %354 = vmatprep.subr.bf16.mxu0 0
        %355 = vmatpush1.bf16.xpose.msra.mxu0 0
        %356 = vmatprep.subr.bf16.mxu0 0
        %357 = vmatpush1.bf16.xpose.msra.mxu0 0
        %358 = vmatprep.subr.bf16.mxu0 0
        %359 = vmatpush1.bf16.xpose.msra.mxu0 0
        %360 = vmatprep.subr.bf16.mxu0 0
        %361 = vmatpush1.bf16.xpose.msra.mxu0 0
        %362 = vmatprep.subr.bf16.mxu0 0
        %363 = vmatpush1.bf16.xpose.msra.mxu0 0
        %364 = vmatprep.subr.bf16.mxu0 0
        %365 = vmatpush1.bf16.xpose.msra.mxu0 0
        %366 = vmatprep.subr.bf16.mxu0 0
        %367 = vmatpush1.bf16.xpose.msra.mxu0 %v350
        %368 = vmatprep.subr.bf16.mxu0 0
        %369 = vmatpush2.bf16.xpose.msra.mxu0 0
        %370 = vmatprep.subr.bf16.mxu0 0
        %371 = vmatpush2.bf16.xpose.msra.mxu0 0
        %372 = vmatprep.subr.bf16.mxu0 0
        %373 = vmatpush2.bf16.xpose.msra.mxu0 0
        %374 = vmatprep.subr.bf16.mxu0 0
        %375 = vmatpush2.bf16.xpose.msra.mxu0 0
        %376 = vmatprep.subr.bf16.mxu0 0
        %377 = vmatpush2.bf16.xpose.msra.mxu0 0
        %378 = vmatprep.subr.bf16.mxu0 0
        %379 = vmatpush2.bf16.xpose.msra.mxu0 0
        %380 = vmatprep.subr.bf16.mxu0 0
        %381 = vmatpush2.bf16.xpose.msra.mxu0 0
        %382 = vmatprep.subr.bf16.mxu0 0
        %383 = vmatpush2.bf16.xpose.msra.mxu0 0
        %384 = vmatprep.mubr.bf16.mxu0 0
        %385 = vmatmul.mubr.bf16.gmra.mxu0 %v347
        %v386 = vpop.f32.mrf.mxu0
        %v387 = vadd.f32 0.0, %v386
        %v388 = vpop.f32.mrf.mxu0
        %v389 = vpop.f32.mrf.mxu0
        %v390 = vpop.f32.mrf.mxu0
        %391 = vdwg.mxu0
        %v392 = vsel %vm345, %v387, -inf
        %393 = vmax.xlane.f32.xlu0 %v392
        %v394 = vpop.xlane.xlu0 %393
        %v395 = vsub.f32 %v387, %v394
        %v396 = vmul.f32 %v395, 1.442695
        %v397 = vpow.pop %v396
        %v398 = vsel %vm345, %v397, 0.0
        %399 = vadd.xlane.f32.xlu0 %v398
        %v400 = vpop.xlane.xlu0 %399
        %v401 = vrcp.pop %v400
        %v402 = vmul.f32 %v397, %v401
        %v403 = vpack.c.bf16 %v402, %v402
        %404 = vrot.lane.b32.xlu0 %v341, 64
        %v405 = vpop.permute.xlu0 %404
        %v407 = vsel %vm345, %v403, 0
        %vm409 = vcmask 1043456
        %v411 = vsel %vm409, %v405, 0
        %413 = vmatprep.subr.bf16.mxu0 0
        %414 = vmatpush1.bf16.msra.mxu0 0
        %415 = vmatprep.subr.bf16.mxu0 0
        %416 = vmatpush1.bf16.msra.mxu0 0
        %417 = vmatprep.subr.bf16.mxu0 0
        %418 = vmatpush1.bf16.msra.mxu0 0
        %419 = vmatprep.subr.bf16.mxu0 0
        %420 = vmatpush1.bf16.msra.mxu0 0
        %421 = vmatprep.subr.bf16.mxu0 0
        %422 = vmatpush1.bf16.msra.mxu0 0
        %423 = vmatprep.subr.bf16.mxu0 0
        %424 = vmatpush1.bf16.msra.mxu0 0
        %425 = vmatprep.subr.bf16.mxu0 0
        %426 = vmatpush1.bf16.msra.mxu0 0
        %427 = vmatprep.subr.bf16.mxu0 0
        %428 = vmatpush1.bf16.msra.mxu0 %v411
        %429 = vmatprep.subr.bf16.mxu0 0
        %430 = vmatpush2.bf16.msra.mxu0 0
        %431 = vmatprep.subr.bf16.mxu0 0
        %432 = vmatpush2.bf16.msra.mxu0 0
        %433 = vmatprep.subr.bf16.mxu0 0
        %434 = vmatpush2.bf16.msra.mxu0 0
        %435 = vmatprep.subr.bf16.mxu0 0
        %436 = vmatpush2.bf16.msra.mxu0 0
        %437 = vmatprep.subr.bf16.mxu0 0
        %438 = vmatpush2.bf16.msra.mxu0 0
        %439 = vmatprep.subr.bf16.mxu0 0
        %440 = vmatpush2.bf16.msra.mxu0 0
        %441 = vmatprep.subr.bf16.mxu0 0
        %442 = vmatpush2.bf16.msra.mxu0 0
        %443 = vmatprep.subr.bf16.mxu0 0
        %444 = vmatpush2.bf16.msra.mxu0 0
        %445 = vmatprep.mubr.bf16.mxu0 0
        %446 = vmatmul.mubr.bf16.gmra.mxu0 %v407
        %v447 = vpop.f32.mrf.mxu0
        %v448 = vadd.f32 0.0, %v447
        %v449 = vpop.f32.mrf.mxu0
        %v450 = vpop.f32.mrf.mxu0
        %v451 = vpop.f32.mrf.mxu0
        %452 = vdwg.mxu0
        %454 = vrot.lane.b32.xlu0 %v340, 120
        %v455 = vpop.permute.xlu0 %454
        %456 = vrot.lane.b32.xlu0 %v341, 88
        %v457 = vpop.permute.xlu0 %456
        %v459 = vsel %vm345, %v455, 0
        %v462 = vsel %vm345, %v457, 0
        %464 = vmatprep.subr.bf16.mxu0 0
        %465 = vmatpush1.bf16.xpose.msra.mxu0 0
        %466 = vmatprep.subr.bf16.mxu0 0
        %467 = vmatpush1.bf16.xpose.msra.mxu0 0
        %468 = vmatprep.subr.bf16.mxu0 0
        %469 = vmatpush1.bf16.xpose.msra.mxu0 0
        %470 = vmatprep.subr.bf16.mxu0 0
        %471 = vmatpush1.bf16.xpose.msra.mxu0 0
        %472 = vmatprep.subr.bf16.mxu0 0
        %473 = vmatpush1.bf16.xpose.msra.mxu0 0
        %474 = vmatprep.subr.bf16.mxu0 0
        %475 = vmatpush1.bf16.xpose.msra.mxu0 0
        %476 = vmatprep.subr.bf16.mxu0 0
        %477 = vmatpush1.bf16.xpose.msra.mxu0 0
        %478 = vmatprep.subr.bf16.mxu0 0
        %479 = vmatpush1.bf16.xpose.msra.mxu0 %v462
        %480 = vmatprep.subr.bf16.mxu0 0
        %481 = vmatpush2.bf16.xpose.msra.mxu0 0
        %482 = vmatprep.subr.bf16.mxu0 0
        %483 = vmatpush2.bf16.xpose.msra.mxu0 0
        %484 = vmatprep.subr.bf16.mxu0 0
        %485 = vmatpush2.bf16.xpose.msra.mxu0 0
        %486 = vmatprep.subr.bf16.mxu0 0
        %487 = vmatpush2.bf16.xpose.msra.mxu0 0
        %488 = vmatprep.subr.bf16.mxu0 0
        %489 = vmatpush2.bf16.xpose.msra.mxu0 0
        %490 = vmatprep.subr.bf16.mxu0 0
        %491 = vmatpush2.bf16.xpose.msra.mxu0 0
        %492 = vmatprep.subr.bf16.mxu0 0
        %493 = vmatpush2.bf16.xpose.msra.mxu0 0
        %494 = vmatprep.subr.bf16.mxu0 0
        %495 = vmatpush2.bf16.xpose.msra.mxu0 0
        %496 = vmatprep.mubr.bf16.mxu0 0
        %497 = vmatmul.mubr.bf16.gmra.mxu0 %v459
        %v498 = vpop.f32.mrf.mxu0
        %v499 = vadd.f32 0.0, %v498
        %v500 = vpop.f32.mrf.mxu0
        %v501 = vpop.f32.mrf.mxu0
        %v502 = vpop.f32.mrf.mxu0
        %503 = vdwg.mxu0
        %v504 = vsel %vm345, %v499, -inf
        %505 = vmax.xlane.f32.xlu0 %v504
        %v506 = vpop.xlane.xlu0 %505
        %v507 = vsub.f32 %v499, %v506
        %v508 = vmul.f32 %v507, 1.442695
        %v509 = vpow.pop %v508
        %v510 = vsel %vm345, %v509, 0.0
        %511 = vadd.xlane.f32.xlu0 %v510
        %v512 = vpop.xlane.xlu0 %511
        %v513 = vrcp.pop %v512
        %v514 = vmul.f32 %v509, %v513
        %v515 = vpack.c.bf16 %v514, %v514
        %516 = vrot.lane.b32.xlu0 %v341, 56
        %v517 = vpop.permute.xlu0 %516
        %v519 = vsel %vm345, %v515, 0
        %v522 = vsel %vm409, %v517, 0
        %524 = vmatprep.subr.bf16.mxu0 0
        %525 = vmatpush1.bf16.msra.mxu0 0
        %526 = vmatprep.subr.bf16.mxu0 0
        %527 = vmatpush1.bf16.msra.mxu0 0
        %528 = vmatprep.subr.bf16.mxu0 0
        %529 = vmatpush1.bf16.msra.mxu0 0
        %530 = vmatprep.subr.bf16.mxu0 0
        %531 = vmatpush1.bf16.msra.mxu0 0
        %532 = vmatprep.subr.bf16.mxu0 0
        %533 = vmatpush1.bf16.msra.mxu0 0
        %534 = vmatprep.subr.bf16.mxu0 0
        %535 = vmatpush1.bf16.msra.mxu0 0
        %536 = vmatprep.subr.bf16.mxu0 0
        %537 = vmatpush1.bf16.msra.mxu0 0
        %538 = vmatprep.subr.bf16.mxu0 0
        %539 = vmatpush1.bf16.msra.mxu0 %v522
        %540 = vmatprep.subr.bf16.mxu0 0
        %541 = vmatpush2.bf16.msra.mxu0 0
        %542 = vmatprep.subr.bf16.mxu0 0
        %543 = vmatpush2.bf16.msra.mxu0 0
        %544 = vmatprep.subr.bf16.mxu0 0
        %545 = vmatpush2.bf16.msra.mxu0 0
        %546 = vmatprep.subr.bf16.mxu0 0
        %547 = vmatpush2.bf16.msra.mxu0 0
        %548 = vmatprep.subr.bf16.mxu0 0
        %549 = vmatpush2.bf16.msra.mxu0 0
        %550 = vmatprep.subr.bf16.mxu0 0
        %551 = vmatpush2.bf16.msra.mxu0 0
        %552 = vmatprep.subr.bf16.mxu0 0
        %553 = vmatpush2.bf16.msra.mxu0 0
        %554 = vmatprep.subr.bf16.mxu0 0
        %555 = vmatpush2.bf16.msra.mxu0 0
        %556 = vmatprep.mubr.bf16.mxu0 0
        %557 = vmatmul.mubr.bf16.gmra.mxu0 %v519
        %v558 = vpop.f32.mrf.mxu0
        %v559 = vadd.f32 0.0, %v558
        %v560 = vpop.f32.mrf.mxu0
        %v561 = vpop.f32.mrf.mxu0
        %v562 = vpop.f32.mrf.mxu0
        %563 = vdwg.mxu0
        %564 = vrot.lane.b32.xlu0 %v340, 112
        %v565 = vpop.permute.xlu0 %564
        %566 = vrot.lane.b32.xlu0 %v341, 80
        %v567 = vpop.permute.xlu0 %566
        %v569 = vsel %vm345, %v565, 0
        %v572 = vsel %vm345, %v567, 0
        %574 = vmatprep.subr.bf16.mxu0 0
        %575 = vmatpush1.bf16.xpose.msra.mxu0 0
        %576 = vmatprep.subr.bf16.mxu0 0
        %577 = vmatpush1.bf16.xpose.msra.mxu0 0
        %578 = vmatprep.subr.bf16.mxu0 0
        %579 = vmatpush1.bf16.xpose.msra.mxu0 0
        %580 = vmatprep.subr.bf16.mxu0 0
        %581 = vmatpush1.bf16.xpose.msra.mxu0 0
        %582 = vmatprep.subr.bf16.mxu0 0
        %583 = vmatpush1.bf16.xpose.msra.mxu0 0
        %584 = vmatprep.subr.bf16.mxu0 0
        %585 = vmatpush1.bf16.xpose.msra.mxu0 0
        %586 = vmatprep.subr.bf16.mxu0 0
        %587 = vmatpush1.bf16.xpose.msra.mxu0 0
        %588 = vmatprep.subr.bf16.mxu0 0
        %589 = vmatpush1.bf16.xpose.msra.mxu0 %v572
        %590 = vmatprep.subr.bf16.mxu0 0
        %591 = vmatpush2.bf16.xpose.msra.mxu0 0
        %592 = vmatprep.subr.bf16.mxu0 0
        %593 = vmatpush2.bf16.xpose.msra.mxu0 0
        %594 = vmatprep.subr.bf16.mxu0 0
        %595 = vmatpush2.bf16.xpose.msra.mxu0 0
        %596 = vmatprep.subr.bf16.mxu0 0
        %597 = vmatpush2.bf16.xpose.msra.mxu0 0
        %598 = vmatprep.subr.bf16.mxu0 0
        %599 = vmatpush2.bf16.xpose.msra.mxu0 0
        %600 = vmatprep.subr.bf16.mxu0 0
        %601 = vmatpush2.bf16.xpose.msra.mxu0 0
        %602 = vmatprep.subr.bf16.mxu0 0
        %603 = vmatpush2.bf16.xpose.msra.mxu0 0
        %604 = vmatprep.subr.bf16.mxu0 0
        %605 = vmatpush2.bf16.xpose.msra.mxu0 0
        %606 = vmatprep.mubr.bf16.mxu0 0
        %607 = vmatmul.mubr.bf16.gmra.mxu0 %v569
        %v608 = vpop.f32.mrf.mxu0
        %v609 = vadd.f32 0.0, %v608
        %v610 = vpop.f32.mrf.mxu0
        %v611 = vpop.f32.mrf.mxu0
        %v612 = vpop.f32.mrf.mxu0
        %613 = vdwg.mxu0
        %v614 = vsel %vm345, %v609, -inf
        %615 = vmax.xlane.f32.xlu0 %v614
        %v616 = vpop.xlane.xlu0 %615
        %v617 = vsub.f32 %v609, %v616
        %v618 = vmul.f32 %v617, 1.442695
        %v619 = vpow.pop %v618
        %v620 = vsel %vm345, %v619, 0.0
        %621 = vadd.xlane.f32.xlu0 %v620
        %v622 = vpop.xlane.xlu0 %621
        %v623 = vrcp.pop %v622
        %v624 = vmul.f32 %v619, %v623
        %v625 = vpack.c.bf16 %v624, %v624
        %626 = vrot.lane.b32.xlu0 %v341, 48
        %v627 = vpop.permute.xlu0 %626
        %v629 = vsel %vm345, %v625, 0
        %v632 = vsel %vm409, %v627, 0
        %634 = vmatprep.subr.bf16.mxu0 0
        %635 = vmatpush1.bf16.msra.mxu0 0
        %636 = vmatprep.subr.bf16.mxu0 0
        %637 = vmatpush1.bf16.msra.mxu0 0
        %638 = vmatprep.subr.bf16.mxu0 0
        %639 = vmatpush1.bf16.msra.mxu0 0
        %640 = vmatprep.subr.bf16.mxu0 0
        %641 = vmatpush1.bf16.msra.mxu0 0
        %642 = vmatprep.subr.bf16.mxu0 0
        %643 = vmatpush1.bf16.msra.mxu0 0
        %644 = vmatprep.subr.bf16.mxu0 0
        %645 = vmatpush1.bf16.msra.mxu0 0
        %646 = vmatprep.subr.bf16.mxu0 0
        %647 = vmatpush1.bf16.msra.mxu0 0
        %648 = vmatprep.subr.bf16.mxu0 0
        %649 = vmatpush1.bf16.msra.mxu0 %v632
        %650 = vmatprep.subr.bf16.mxu0 0
        %651 = vmatpush2.bf16.msra.mxu0 0
        %652 = vmatprep.subr.bf16.mxu0 0
        %653 = vmatpush2.bf16.msra.mxu0 0
        %654 = vmatprep.subr.bf16.mxu0 0
        %655 = vmatpush2.bf16.msra.mxu0 0
        %656 = vmatprep.subr.bf16.mxu0 0
        %657 = vmatpush2.bf16.msra.mxu0 0
        %658 = vmatprep.subr.bf16.mxu0 0
        %659 = vmatpush2.bf16.msra.mxu0 0
        %660 = vmatprep.subr.bf16.mxu0 0
        %661 = vmatpush2.bf16.msra.mxu0 0
        %662 = vmatprep.subr.bf16.mxu0 0
        %663 = vmatpush2.bf16.msra.mxu0 0
        %664 = vmatprep.subr.bf16.mxu0 0
        %665 = vmatpush2.bf16.msra.mxu0 0
        %666 = vmatprep.mubr.bf16.mxu0 0
        %667 = vmatmul.mubr.bf16.gmra.mxu0 %v629
        %v668 = vpop.f32.mrf.mxu0
        %v669 = vadd.f32 0.0, %v668
        %v670 = vpop.f32.mrf.mxu0
        %v671 = vpop.f32.mrf.mxu0
        %v672 = vpop.f32.mrf.mxu0
        %673 = vdwg.mxu0
        %674 = vrot.lane.b32.xlu0 %v340, 104
        %v675 = vpop.permute.xlu0 %674
        %676 = vrot.lane.b32.xlu0 %v341, 72
        %v677 = vpop.permute.xlu0 %676
        %v679 = vsel %vm345, %v675, 0
        %v682 = vsel %vm345, %v677, 0
        %684 = vmatprep.subr.bf16.mxu0 0
        %685 = vmatpush1.bf16.xpose.msra.mxu0 0
        %686 = vmatprep.subr.bf16.mxu0 0
        %687 = vmatpush1.bf16.xpose.msra.mxu0 0
        %688 = vmatprep.subr.bf16.mxu0 0
        %689 = vmatpush1.bf16.xpose.msra.mxu0 0
        %690 = vmatprep.subr.bf16.mxu0 0
        %691 = vmatpush1.bf16.xpose.msra.mxu0 0
        %692 = vmatprep.subr.bf16.mxu0 0
        %693 = vmatpush1.bf16.xpose.msra.mxu0 0
        %694 = vmatprep.subr.bf16.mxu0 0
        %695 = vmatpush1.bf16.xpose.msra.mxu0 0
        %696 = vmatprep.subr.bf16.mxu0 0
        %697 = vmatpush1.bf16.xpose.msra.mxu0 0
        %698 = vmatprep.subr.bf16.mxu0 0
        %699 = vmatpush1.bf16.xpose.msra.mxu0 %v682
        %700 = vmatprep.subr.bf16.mxu0 0
        %701 = vmatpush2.bf16.xpose.msra.mxu0 0
        %702 = vmatprep.subr.bf16.mxu0 0
        %703 = vmatpush2.bf16.xpose.msra.mxu0 0
        %704 = vmatprep.subr.bf16.mxu0 0
        %705 = vmatpush2.bf16.xpose.msra.mxu0 0
        %706 = vmatprep.subr.bf16.mxu0 0
        %707 = vmatpush2.bf16.xpose.msra.mxu0 0
        %708 = vmatprep.subr.bf16.mxu0 0
        %709 = vmatpush2.bf16.xpose.msra.mxu0 0
        %710 = vmatprep.subr.bf16.mxu0 0
        %711 = vmatpush2.bf16.xpose.msra.mxu0 0
        %712 = vmatprep.subr.bf16.mxu0 0
        %713 = vmatpush2.bf16.xpose.msra.mxu0 0
        %714 = vmatprep.subr.bf16.mxu0 0
        %715 = vmatpush2.bf16.xpose.msra.mxu0 0
        %716 = vmatprep.mubr.bf16.mxu0 0
        %717 = vmatmul.mubr.bf16.gmra.mxu0 %v679
        %v718 = vpop.f32.mrf.mxu0
        %v719 = vadd.f32 0.0, %v718
        %v720 = vpop.f32.mrf.mxu0
        %v721 = vpop.f32.mrf.mxu0
        %v722 = vpop.f32.mrf.mxu0
        %723 = vdwg.mxu0
        %v724 = vsel %vm345, %v719, -inf
        %725 = vmax.xlane.f32.xlu0 %v724
        %v726 = vpop.xlane.xlu0 %725
        %v727 = vsub.f32 %v719, %v726
        %v728 = vmul.f32 %v727, 1.442695
        %v729 = vpow.pop %v728
        %v730 = vsel %vm345, %v729, 0.0
        %731 = vadd.xlane.f32.xlu0 %v730
        %v732 = vpop.xlane.xlu0 %731
        %v733 = vrcp.pop %v732
        %v734 = vmul.f32 %v729, %v733
        %v735 = vpack.c.bf16 %v734, %v734
        %736 = vrot.lane.b32.xlu0 %v341, 40
        %v737 = vpop.permute.xlu0 %736
        %v739 = vsel %vm345, %v735, 0
        %v742 = vsel %vm409, %v737, 0
        %744 = vmatprep.subr.bf16.mxu0 0
        %745 = vmatpush1.bf16.msra.mxu0 0
        %746 = vmatprep.subr.bf16.mxu0 0
        %747 = vmatpush1.bf16.msra.mxu0 0
        %748 = vmatprep.subr.bf16.mxu0 0
        %749 = vmatpush1.bf16.msra.mxu0 0
        %750 = vmatprep.subr.bf16.mxu0 0
        %751 = vmatpush1.bf16.msra.mxu0 0
        %752 = vmatprep.subr.bf16.mxu0 0
        %753 = vmatpush1.bf16.msra.mxu0 0
        %754 = vmatprep.subr.bf16.mxu0 0
        %755 = vmatpush1.bf16.msra.mxu0 0
        %756 = vmatprep.subr.bf16.mxu0 0
        %757 = vmatpush1.bf16.msra.mxu0 0
        %758 = vmatprep.subr.bf16.mxu0 0
        %759 = vmatpush1.bf16.msra.mxu0 %v742
        %760 = vmatprep.subr.bf16.mxu0 0
        %761 = vmatpush2.bf16.msra.mxu0 0
        %762 = vmatprep.subr.bf16.mxu0 0
        %763 = vmatpush2.bf16.msra.mxu0 0
        %764 = vmatprep.subr.bf16.mxu0 0
        %765 = vmatpush2.bf16.msra.mxu0 0
        %766 = vmatprep.subr.bf16.mxu0 0
        %767 = vmatpush2.bf16.msra.mxu0 0
        %768 = vmatprep.subr.bf16.mxu0 0
        %769 = vmatpush2.bf16.msra.mxu0 0
        %770 = vmatprep.subr.bf16.mxu0 0
        %771 = vmatpush2.bf16.msra.mxu0 0
        %772 = vmatprep.subr.bf16.mxu0 0
        %773 = vmatpush2.bf16.msra.mxu0 0
        %774 = vmatprep.subr.bf16.mxu0 0
        %775 = vmatpush2.bf16.msra.mxu0 0
        %776 = vmatprep.mubr.bf16.mxu0 0
        %777 = vmatmul.mubr.bf16.gmra.mxu0 %v739
        %v778 = vpop.f32.mrf.mxu0
        %v779 = vadd.f32 0.0, %v778
        %v780 = vpop.f32.mrf.mxu0
        %v781 = vpop.f32.mrf.mxu0
        %v782 = vpop.f32.mrf.mxu0
        %783 = vdwg.mxu0
        %785 = vrot.lane.b32.xlu0 %v559, 8
        %v786 = vpop.permute.xlu0 %785
        %789 = vrot.lane.b32.xlu0 %v669, 16
        %v790 = vpop.permute.xlu0 %789
        %793 = vrot.lane.b32.xlu0 %v779, 24
        %v794 = vpop.permute.xlu0 %793
        %v796 = vsel %vm345, %v448, %v786
        %vm797 = vcmask 130048
        %v798 = vsel %vm797, %v796, %v790
        %vm799 = vcmask 195584
        %v800 = vsel %vm799, %v798, %v794
        %v801 = vpack.c.bf16 %v800, %v800
        %v802 = vld [vmem:[#allocation7] sm:$0xf]
        %v803 = vld [vmem:[#allocation7 + $0x4] sm:$0xf]
        %v804 = vld [vmem:[#allocation7 + $0x8] sm:$0xf]
        %v805 = vld [vmem:[#allocation7 + $0xc] sm:$0xf]
        %v806 = vld [vmem:[%s4] sm:$0x1]
        %v808 = vlaneseq
        %v809 = vshrl.u32 %v808, 7
        %v810 = vsub.s32 0, %v809
        %v811 = vrot.slane %v806, %v810
        %v817 = vunpack.c.l.b16 %v802
        %v818 = vunpack.c.l.b16 %v803
        %v819 = vunpack.c.l.b16 %v804
        %v820 = vunpack.c.l.b16 %v805
        %v821 = vpack.c.b16 %v818, %v817
        %v822 = vpack.c.b16 %v820, %v819
        %v826 = vsel %vm295, %v801, 0
        %828 = vmatprep.subr.bf16.mxu0 0
        %829 = vmatpush1.bf16.msra.mxu0 0
        %830 = vmatprep.subr.bf16.mxu0 0
        %831 = vmatpush1.bf16.msra.mxu0 0
        %832 = vmatprep.subr.bf16.mxu0 0
        %833 = vmatpush1.bf16.msra.mxu0 0
        %834 = vmatprep.subr.bf16.mxu0 0
        %835 = vmatpush1.bf16.msra.mxu0 0
        %836 = vmatprep.subr.bf16.mxu0 0
        %837 = vmatpush1.bf16.msra.mxu0 0
        %838 = vmatprep.subr.bf16.mxu0 0
        %839 = vmatpush1.bf16.msra.mxu0 0
        %840 = vmatprep.subr.bf16.mxu0 0
        %841 = vmatpush1.bf16.msra.mxu0 %v822
        %842 = vmatprep.subr.bf16.mxu0 0
        %843 = vmatpush1.bf16.msra.mxu0 %v821
        %844 = vmatprep.subr.bf16.mxu0 0
        %845 = vmatpush2.bf16.msra.mxu0 0
        %846 = vmatprep.subr.bf16.mxu0 0
        %847 = vmatpush2.bf16.msra.mxu0 0
        %848 = vmatprep.subr.bf16.mxu0 0
        %849 = vmatpush2.bf16.msra.mxu0 0
        %850 = vmatprep.subr.bf16.mxu0 0
        %851 = vmatpush2.bf16.msra.mxu0 0
        %852 = vmatprep.subr.bf16.mxu0 0
        %853 = vmatpush2.bf16.msra.mxu0 0
        %854 = vmatprep.subr.bf16.mxu0 0
        %855 = vmatpush2.bf16.msra.mxu0 0
        %856 = vmatprep.subr.bf16.mxu0 0
        %857 = vmatpush2.bf16.msra.mxu0 0
        %858 = vmatprep.subr.bf16.mxu0 0
        %859 = vmatpush2.bf16.msra.mxu0 0
        %860 = vmatprep.mubr.bf16.mxu0 0
        %861 = vmatmul.mubr.bf16.gmra.mxu0 %v826
        %v862 = vpop.f32.mrf.mxu0
        %v863 = vadd.f32 %v811, %v862
        %v864 = vpop.f32.mrf.mxu0
        %v865 = vpop.f32.mrf.mxu0
        %v866 = vpop.f32.mrf.mxu0
        %867 = vdwg.mxu0
        %868 = vst.msk [vmem:[%s268] sm:$0xff] %vm295, %v863
        %s869 = sand.u32 %s141, 1
        %s870 = scalar_lea.sflag [#allocation4], %s869
        %s871 = sand.u32 %s141, 1
        %s872 = smul.addr %s871, 8
        %s873 = scalar_lea.vmem [#allocation8], %s872
        // Predicated region
        $region53: #{tpu_custom_call.1} parent=39 // pred_check
          %p874 = pneg %p151
        $region54: #{tpu_custom_call.1} parent=39 // pred_check_branch
          %876 = sbr.rel (%p874) target = $region56
        $region55: #{tpu_custom_call.1} parent=39 // pred_region
          %s878 = ssub.s32 128, 128
          %879 = vsyncadd %s870, %s878
          %s880 = smul.addr %s23, 128
          %s881 = scalar_lea.hbm %s5, %s880
          %s883 = sshll.u32 %s873, 4
          %s884 = int_to_ptr.vmem [resolvable:$true] %s883
          %886 = dma.vmem_to_hbm [thread:$0]  %s884, 128, %s881, %s870
        $region56: #{tpu_custom_call.1} parent=39 // pred_fallthru
          _
      $region40: #{tpu_custom_call.1} parent=5 // pred_fallthru
        _
      %p887 = scmp.le.s32.totalorder 2, %s18
      // Predicated region
      $region57: #{tpu_custom_call.1} parent=5 // pred_check
        %p888 = pneg %p887
      $region58: #{tpu_custom_call.1} parent=5 // pred_check_branch
        %890 = sbr.rel (%p888) target = $region60
      $region59: #{tpu_custom_call.1} parent=5 // pred_region
        %s891 = ssub.s32 %s18, 2
        // Predicated region
        $region61: #{tpu_custom_call.1} parent=59 // pred_check
          %p892 = pneg %p157
        $region62: #{tpu_custom_call.1} parent=59 // pred_check_branch
          %894 = sbr.rel (%p892) target = $region64
        $region63: #{tpu_custom_call.1} parent=59 // pred_region
          %s895 = sand.u32 %s142, 1
          %s896 = scalar_lea.sflag [#allocation4], %s895
          %s897 = sand.u32 %s142, 1
          %s898 = smul.addr %s897, 8
          %s899 = scalar_lea.vmem [#allocation8], %s898
          %900 = dma.done %s896, 128
        $region64: #{tpu_custom_call.1} parent=59 // pred_fallthru
          _
      $region60: #{tpu_custom_call.1} parent=5 // pred_fallthru
        _
    $region6: #{tpu_custom_call.1} parent=1 // loop_footer
      %s22 = sadd.s32 1, %s18
    $region7: #{tpu_custom_call.1} parent=1 // loop_footer_branch
      %17 = sbr.rel target = $region3
    $region8: #{tpu_custom_call.1} parent=1 // loop_exit
      _
    %901 = vsyncpa [#allocation3], 1
    %s902 = scalar_lea.sflag [#allocation3], 1
    %903 = vsyncpa %s902, 1
    %904 = vsyncpa [#allocation6], 1
    %905 = vsyncpa [#allocation4], 1
    %s906 = scalar_lea.sflag [#allocation4], 1
    %907 = vsyncpa %s906, 1

</llo_original>
